<compile_context>
chip_gen: v7x
topology: tpu7x:2x2x1
jax: 0.10.0
libtpu: 0.0.40
codegen_flags: <defaults>
</compile_context>

<pallas_src>
import functools
import math

import jax
import jax.numpy as jnp
from jax.experimental import pallas as pl
from jax.experimental.pallas import tpu as pltpu


_ON_TPU = jax.default_backend() == "tpu"


# ----------------------------------------------------------------------------
# In-kernel pe broadcast helpers
# ----------------------------------------------------------------------------
def _bcast_rows(pe_tile, n):
    """(tl, E) -> (tl*n, E): each pe row repeated n times (flat (L*N, E) layout)."""
    if n == 1:
        return pe_tile
    tl, e = pe_tile.shape
    return jnp.broadcast_to(pe_tile[:, None, :], (tl, n, e)).reshape(tl * n, e)


def _bcast_mid(pe_tile):
    """(tl, E) -> (tl, 1, E): free sublane broadcast against a (tl, N, E) block."""
    return pe_tile[:, None, :]


# ----------------------------------------------------------------------------
# Pallas kernels
# ----------------------------------------------------------------------------
def _pe_add_kernel(x_ref, pe_ref, o_ref, *, bcast):
    o_ref[...] = (x_ref[...] + bcast(pe_ref[...])).astype(o_ref.dtype)


def _pe_add_dropout_prng_kernel(seed_ref, x_ref, pe_ref, o_ref, *, bcast, threshold, scale):
    # Distinct PRNG stream per grid step: program_id folded in as a separate word.
    pltpu.prng_seed(seed_ref[0], pl.program_id(0))
    y = x_ref[...].astype(jnp.float32) + bcast(pe_ref[...]).astype(jnp.float32)
    bits = pltpu.bitcast(pltpu.prng_random_bits(y.shape), jnp.uint32)
    keep = bits >= jnp.uint32(threshold)          # P(keep) = 1 - rate (integer compare)
    o_ref[...] = jnp.where(keep, y * jnp.float32(scale), 0.0).astype(o_ref.dtype)


def _pe_add_dropout_bits_kernel(x_ref, pe_ref, bits_ref, o_ref, *, bcast, threshold, scale):
    # Portable fallback: random bits generated outside (jax.random.bits) and tiled in.
    y = x_ref[...].astype(jnp.float32) + bcast(pe_ref[...]).astype(jnp.float32)
    keep = bits_ref[...] >= jnp.uint32(threshold)
    o_ref[...] = jnp.where(keep, y * jnp.float32(scale), 0.0).astype(o_ref.dtype)


# ----------------------------------------------------------------------------
# Tiling
# ----------------------------------------------------------------------------
def _seq_rows_per_block(L, N, E, itemsize, budget_bytes=2 << 20):
    """Sequence rows per grid step.

    ~2 MiB per x tile keeps the double-buffered footprint (x + pe + optional bits
    + out) under v5e's 16 MiB default scoped VMEM and far under v7x's 64 MiB,
    while staying on the ~85% HBM-roofline plateau.  Capped at ceil(L/2) so big
    inputs always have >= 2 grid steps for v7x's two TensorCores; rounded up to a
    multiple of 8 so pe / flattened-x blocks are sublane-aligned.
    """
    bytes_per_seq_row = max(1, N * E * itemsize)
    rows = max(1, budget_bytes // bytes_per_seq_row)
    rows = min(rows, max(1, -(-L // 2)))   # >= 2 grid steps when there is enough work
    rows = min(rows, L)
    rows = -(-rows // 8) * 8               # sublane multiple
    return rows


# ----------------------------------------------------------------------------
# pallas_call wrapper
# ----------------------------------------------------------------------------
def positional_encoding_fwd(x, pe, *, rate=0.0, training=False, seed=0):
    """x: (L, N, E) seq-first; pe: (max_len, E) table. Returns (L, N, E) in x.dtype."""
    L, N, E = x.shape
    max_len, e_pe = pe.shape
    assert e_pe == E, "pe feature dim must match x"
    assert L <= max_len, "sequence longer than max_len"
    rate = float(rate)

    if training and rate >= 1.0:           # torch nn.Dropout(p=1.0) zeroes everything
        return jnp.zeros_like(x)

    itemsize = jnp.dtype(x.dtype).itemsize
    sub_min = max(8, 32 // itemsize)        # sublanes per vreg for this dtype
    use_3d = (E % 128 == 0) and (N % sub_min == 0)

    tl = _seq_rows_per_block(L, N, E, itemsize)
    grid = (pl.cdiv(L, tl),)

    pe_spec = pl.BlockSpec((tl, E), lambda i: (i, 0))
    if use_3d:
        # Dense everywhere: E fills lanes, N fills sublanes; pe broadcast is free.
        x_in = x
        data_spec = pl.BlockSpec((tl, N, E), lambda i: (i, 0, 0))
        out_shape = jax.ShapeDtypeStruct((L, N, E), x.dtype)
        bcast = _bcast_mid
    else:
        # Small N / non-128-multiple E: flatten to (L*N, E) (free, contiguous) so
        # sublanes stay dense; repeat pe across the batch inside the kernel.
        x_in = x.reshape(L * N, E)
        data_spec = pl.BlockSpec((tl * N, E), lambda i: (i, 0))
        out_shape = jax.ShapeDtypeStruct((L * N, E), x.dtype)
        bcast = functools.partial(_bcast_rows, n=N)

    cparams = pltpu.CompilerParams(dimension_semantics=("parallel",))
    base_bytes = (2 * L * N * E + grid[0] * tl * E) * itemsize

    if (not training) or rate == 0.0:
        out = pl.pallas_call(
            functools.partial(_pe_add_kernel, bcast=bcast),
            out_shape=out_shape,
            grid=grid,
            in_specs=[data_spec, pe_spec],
            out_specs=data_spec,
            compiler_params=cparams,
            cost_estimate=pl.CostEstimate(
                flops=L * N * E, transcendentals=0, bytes_accessed=base_bytes),
        )(x_in, pe)
        return out if use_3d else out.reshape(L, N, E)

    # Fused dropout path.
    threshold = min(int(round(rate * 4294967296.0)), 4294967295)
    scale = 1.0 / (1.0 - rate)

    if _ON_TPU:
        # On-chip PRNG: one HBM read of x + one write, no extra mask traffic.
        kernel = functools.partial(
            _pe_add_dropout_prng_kernel, bcast=bcast, threshold=threshold, scale=scale)
        seed_arr = jnp.asarray([seed], dtype=jnp.int32)
        out = pl.pallas_call(
            kernel,
            out_shape=out_shape,
            grid=grid,
            in_specs=[pl.BlockSpec(memory_space=pltpu.MemorySpace.SMEM),  # scalar seed
                      data_spec, pe_spec],
            out_specs=data_spec,
            compiler_params=cparams,
            cost_estimate=pl.CostEstimate(
                flops=3 * L * N * E, transcendentals=0, bytes_accessed=base_bytes),
        )(seed_arr, x_in, pe)
    else:
        # Portable fallback (e.g. interpret on CPU): host-generated random bits.
        bits = jax.random.bits(jax.random.PRNGKey(seed), x_in.shape, dtype=jnp.uint32)
        kernel = functools.partial(
            _pe_add_dropout_bits_kernel, bcast=bcast, threshold=threshold, scale=scale)
        out = pl.pallas_call(
            kernel,
            out_shape=out_shape,
            grid=grid,
            in_specs=[data_spec, pe_spec, data_spec],
            out_specs=data_spec,
            compiler_params=cparams,
            cost_estimate=pl.CostEstimate(
                flops=3 * L * N * E, transcendentals=0,
                bytes_accessed=base_bytes + L * N * E * 4),
        )(x_in, pe, bits)
    return out if use_3d else out.reshape(L, N, E)


# ----------------------------------------------------------------------------
# Module wrapper (buffer construction mirrors the torch __init__)
# ----------------------------------------------------------------------------
class PositionalEncodingPallas:
    def __init__(self, nfeature, dropout=0.1, max_len=5000, dtype=jnp.float32):
        assert nfeature % 2 == 0, "nfeature must be even (as in the torch module)"
        assert 0.0 <= float(dropout) <= 1.0
        self.rate = float(dropout)
        position = jnp.arange(max_len, dtype=jnp.float32)[:, None]            # (max_len, 1)
        div_term = jnp.exp(
            jnp.arange(0, nfeature, 2, dtype=jnp.float32)
            * (-math.log(10000.0) / nfeature))                                # (nfeature//2,)
        ang = position * div_term                                             # (max_len, nfeature//2)
        pe = jnp.zeros((max_len, nfeature), jnp.float32)
        pe = pe.at[:, 0::2].set(jnp.sin(ang))
        pe = pe.at[:, 1::2].set(jnp.cos(ang))
        # Stored once, in compute dtype, as a 2D table; the batch broadcast
        # (torch's unsqueeze/transpose) happens inside the kernel for free.
        self.pe = pe.astype(dtype)                                            # (max_len, nfeature)

    def __call__(self, x, *, training=False, seed=0):
        return positional_encoding_fwd(
            x, self.pe, rate=self.rate, training=training, seed=seed)


# ----------------------------------------------------------------------------
# Pure-JAX reference (eval mode: dropout is identity)
# ----------------------------------------------------------------------------
def reference_eval(x, pe2d):
    return x + pe2d[: x.shape[0]][:, None, :]


if __name__ == "__main__":
    # Case 1: small batch / narrow features -> flattened (L*N, E) layout path.
    L1, N1, E1 = 8, 2, 32
    m1 = PositionalEncodingPallas(E1, dropout=0.1, max_len=5000)
    x1 = jax.random.normal(jax.random.PRNGKey(0), (L1, N1, E1), jnp.float32)
    out1 = m1(x1, training=False)
    jax.block_until_ready(out1)
    ref1 = reference_eval(x1, m1.pe)
    assert out1.shape == (L1, N1, E1)
    assert jnp.allclose(out1, ref1, atol=1e-6, rtol=1e-6)

    # Case 2: lane/sublane-dense shapes -> 3D (tl, N, E) fast path with a 2-step grid.
    L2, N2, E2 = 16, 8, 128
    m2 = PositionalEncodingPallas(E2, dropout=0.1, max_len=5000)
    x2 = jax.random.normal(jax.random.PRNGKey(1), (L2, N2, E2), jnp.float32)
    out2 = m2(x2, training=False)
    jax.block_until_ready(out2)
    ref2 = reference_eval(x2, m2.pe)
    assert out2.shape == (L2, N2, E2)
    assert jnp.allclose(out2, ref2, atol=1e-6, rtol=1e-6)

    # Training path: fused dropout. RNG bits differ from torch, so verify the
    # defining property: every element is either exactly dropped (0) or kept and
    # scaled by 1/(1-p).
    for m, x, ref in ((m1, x1, ref1), (m2, x2, ref2)):
        out_tr = m(x, training=True, seed=1234)
        jax.block_until_ready(out_tr)
        scale = 1.0 / (1.0 - m.rate)
        dropped = jnp.isclose(out_tr, 0.0, atol=1e-6)
        kept = jnp.isclose(out_tr, ref * scale, atol=1e-4, rtol=1e-4)
        assert bool(jnp.all(dropped | kept))

    print("KERNEL_OK")
</pallas_src>

<mosaic_0001>
module attributes {stable_mosaic.version = 11 : i64} {
  func.func @_pe_add_kernel(%arg0: i32, %arg1: memref<16x32xf32, #tpu.memory_space<vmem>>, %arg2: memref<8x32xf32, #tpu.memory_space<vmem>>, %arg3: memref<16x32xf32, #tpu.memory_space<vmem>>) attributes {dimension_semantics = [#tpu.dimension_semantics<parallel>], iteration_bounds = array<i64: 1>, scalar_prefetch = 0 : i64, scratch_operands = 0 : i64, tpu.core_type = #tpu.core_type<tc>, window_params = [{transform_indices = @transform_0, window_bounds = array<i64: 16, 32>}, {transform_indices = @transform_1, window_bounds = array<i64: 8, 32>}, {transform_indices = @transform_2, window_bounds = array<i64: 16, 32>}]} {
    %c0 = arith.constant 0 : index
    %c0_0 = arith.constant 0 : index
    %0 = vector.load %arg1[%c0, %c0_0] : memref<16x32xf32, #tpu.memory_space<vmem>>, vector<16x32xf32>
    %c0_1 = arith.constant 0 : index
    %c0_2 = arith.constant 0 : index
    %1 = vector.load %arg2[%c0_1, %c0_2] : memref<8x32xf32, #tpu.memory_space<vmem>>, vector<8x32xf32>
    %2 = vector.shape_cast %1 : vector<8x32xf32> to vector<8x1x32xf32>
    %3 = vector.shape_cast %2 : vector<8x1x32xf32> to vector<8x1x32xf32>
    %4 = vector.broadcast %3 : vector<8x1x32xf32> to vector<8x2x32xf32>
    %5 = vector.shape_cast %4 : vector<8x2x32xf32> to vector<16x32xf32>
    %6 = arith.addf %0, %5 : vector<16x32xf32>
    %c0_3 = arith.constant 0 : index
    %c0_4 = arith.constant 0 : index
    %7 = vector.load %arg3[%c0_3, %c0_4] : memref<16x32xf32, #tpu.memory_space<vmem>>, vector<16x32xf32>
    tpu.vector_store %arg3[%c0_3, %c0_4], %6 {strides = array<i32>} : memref<16x32xf32, #tpu.memory_space<vmem>>, vector<16x32xf32>,
    return
  }
  func.func @transform_0(%arg0: i32) -> (i32, i32) {
    %c0_i32 = arith.constant 0 : i32
    %c0_i32_0 = arith.constant 0 : i32
    return %arg0, %c0_i32 : i32, i32
  }
  func.func @transform_1(%arg0: i32) -> (i32, i32) {
    %c0_i32 = arith.constant 0 : i32
    %c0_i32_0 = arith.constant 0 : i32
    return %arg0, %c0_i32 : i32, i32
  }
  func.func @transform_2(%arg0: i32) -> (i32, i32) {
    %c0_i32 = arith.constant 0 : i32
    %c0_i32_0 = arith.constant 0 : i32
    return %arg0, %c0_i32 : i32, i32
  }
}

</mosaic_0001>

<llo_original>
// kernel: tpu_custom_call.1
$region0: #{tpu_custom_call.1}
  #allocation0 [shape = 'u32[]', space=smem, size = 0x4, offset = 0x4, fixed_abs, tag = 'smem constant byte address 0x4 - core index']
  #allocation1 [shape = 'u32[144,128]{1,0:T(1,128)}', space=vmem, size = 0x12000, scoped, tag = 'internal scratch']
  %s0 = inlined_call_operand.vmem [shape: f32[16,32], index: 0, kind: input, shape index: {}]
  %s1 = inlined_call_operand.vmem [shape: f32[5000,32], index: 1, kind: input, shape index: {}]
  %s2 = inlined_call_operand.hbm [shape: f32[16,32], index: 2, kind: output, shape index: {}]
  %s3 = sld [smem:[#allocation0]]
  $region18: #{tpu_custom_call.1} parent=0
    _
  %s5 = ssub.s32 1, %s3
  %s6 = scalar_select 0, %s5, %s3
  $region1: #{tpu_custom_call.1} parent=0
    #allocation2 [shape = 'u8[8192]{0}', space=vmem, size = 0x2000, scoped, tag = 'output window, operand 0, single buffered']
    #allocation3 [shape = 's32[1]{0}', space=sflag, size = 0x4, scoped, tag = 'scoped memory for tpu_custom_call.1']
    %7 = vsyncpa [#allocation3], 0
    // Predicated region
    $region2: #{tpu_custom_call.1} parent=1 // pred_check
      _
    $region3: #{tpu_custom_call.1} parent=1 // pred_check_branch
      %9 = sbr.rel (0) target = $region5
    $region4: #{tpu_custom_call.1} parent=1 // pred_region
      _
    $region5: #{tpu_custom_call.1} parent=1 // pred_fallthru
      _
    // Predicated region
    $region6: #{tpu_custom_call.1} parent=1 // pred_check
      _
    $region7: #{tpu_custom_call.1} parent=1 // pred_check_branch
      %11 = sbr.rel (0) target = $region9
    $region8: #{tpu_custom_call.1} parent=1 // pred_region
      _
    $region9: #{tpu_custom_call.1} parent=1 // pred_fallthru
      _
    %v12 = vld [vmem:[%s0] sm:$0xff]
    %v13 = vld [vmem:[%s0 + $0x8] sm:$0xff]
    %v14 = vld [vmem:[%s1] sm:$0xff]
    %v16 = vcombine.high %v14, %v14
    %v18 = vunpack.c.l.s4 1966171168
    %v19 = vunpack.c.0.s8 %v18
    %v20 = vlaneseq
    %v21 = vshrl.u32 %v20, 7
    %v22 = vsub.s32 %v19, %v21
    %v23 = vrot.slane %v14, %v22
    %v25 = vunpack.c.l.s4 1966171168
    %v26 = vunpack.c.0.s8 %v25
    %v27 = vlaneseq
    %v28 = vshrl.u32 %v27, 7
    %v29 = vsub.s32 %v26, %v28
    %v30 = vrot.slane %v16, %v29
    %v31 = vcombine.high %v23, %v23
    %v32 = vcombine.high %v30, %v30
    %v34 = vunpack.c.l.s4 1966171168
    %v35 = vunpack.c.0.s8 %v34
    %v36 = vlaneseq
    %v37 = vshrl.u32 %v36, 7
    %v38 = vsub.s32 %v35, %v37
    %v39 = vrot.slane %v23, %v38
    %v41 = vunpack.c.l.s4 1966171168
    %v42 = vunpack.c.0.s8 %v41
    %v43 = vlaneseq
    %v44 = vshrl.u32 %v43, 7
    %v45 = vsub.s32 %v42, %v44
    %v46 = vrot.slane %v30, %v45
    %v48 = vunpack.c.l.s4 1966171168
    %v49 = vunpack.c.0.s8 %v48
    %v50 = vlaneseq
    %v51 = vshrl.u32 %v50, 7
    %v52 = vsub.s32 %v49, %v51
    %v53 = vrot.slane %v31, %v52
    %v55 = vunpack.c.l.s4 1966171168
    %v56 = vunpack.c.0.s8 %v55
    %v57 = vlaneseq
    %v58 = vshrl.u32 %v57, 7
    %v59 = vsub.s32 %v56, %v58
    %v60 = vrot.slane %v32, %v59
    %v61 = vcombine.high %v39, %v39
    %v62 = vcombine.high %v46, %v46
    %v63 = vcombine.high %v53, %v53
    %v64 = vcombine.high %v60, %v60
    %v65 = vlaneseq
    %v66 = vshrl.u32 %v65, 7
    %v67 = vsub.s32 0, %v66
    %v68 = vrot.slane %v39, %v67
    %v69 = vlaneseq
    %v70 = vshrl.u32 %v69, 7
    %v71 = vsub.s32 0, %v70
    %v72 = vrot.slane %v53, %v71
    %v73 = vlaneseq
    %v74 = vshrl.u32 %v73, 7
    %v75 = vsub.s32 0, %v74
    %v76 = vrot.slane %v61, %v75
    %v77 = vlaneseq
    %v78 = vshrl.u32 %v77, 7
    %v79 = vsub.s32 0, %v78
    %v80 = vrot.slane %v63, %v79
    %v81 = vlaneseq
    %v82 = vshrl.u32 %v81, 7
    %v83 = vsub.s32 0, %v82
    %v84 = vrot.slane %v46, %v83
    %v85 = vlaneseq
    %v86 = vshrl.u32 %v85, 7
    %v87 = vsub.s32 0, %v86
    %v88 = vrot.slane %v60, %v87
    %v89 = vlaneseq
    %v90 = vshrl.u32 %v89, 7
    %v91 = vsub.s32 0, %v90
    %v92 = vrot.slane %v62, %v91
    %v93 = vlaneseq
    %v94 = vshrl.u32 %v93, 7
    %v95 = vsub.s32 0, %v94
    %v96 = vrot.slane %v64, %v95
    %v97 = vcombine.low %v68, %v72
    %v98 = vcombine.low %v76, %v80
    %v100 = vunpack.c.l.s4 1983009808
    %v101 = vunpack.c.0.s8 %v100
    %v102 = vlaneseq
    %v103 = vshrl.u32 %v102, 7
    %v104 = vsub.s32 %v101, %v103
    %v105 = vrot.slane %v97, %v104
    %v107 = vunpack.c.l.s4 1983009808
    %v108 = vunpack.c.0.s8 %v107
    %v109 = vlaneseq
    %v110 = vshrl.u32 %v109, 7
    %v111 = vsub.s32 %v108, %v110
    %v112 = vrot.slane %v98, %v111
    %v113 = vcombine.low %v105, %v112
    %v114 = vcombine.low %v84, %v88
    %v115 = vcombine.low %v92, %v96
    %v117 = vunpack.c.l.s4 1983009808
    %v118 = vunpack.c.0.s8 %v117
    %v119 = vlaneseq
    %v120 = vshrl.u32 %v119, 7
    %v121 = vsub.s32 %v118, %v120
    %v122 = vrot.slane %v114, %v121
    %v124 = vunpack.c.l.s4 1983009808
    %v125 = vunpack.c.0.s8 %v124
    %v126 = vlaneseq
    %v127 = vshrl.u32 %v126, 7
    %v128 = vsub.s32 %v125, %v127
    %v129 = vrot.slane %v115, %v128
    %v130 = vcombine.low %v122, %v129
    %v133 = vadd.f32 %v12, %v113
    %v134 = vadd.f32 %v13, %v130
    %vm135 = vcmask 261120
    %136 = vst.msk [vmem:[#allocation2] sm:$0xff] %vm135, %v133
    %137 = vst.msk [vmem:[#allocation2 + $0x8] sm:$0xff] %vm135, %v134
    // Predicated region
    $region10: #{tpu_custom_call.1} parent=1 // pred_check
      _
    $region11: #{tpu_custom_call.1} parent=1 // pred_check_branch
      %139 = sbr.rel (0) target = $region13
    $region12: #{tpu_custom_call.1} parent=1 // pred_region
      %s141 = ssub.s32 256, 256
      %142 = vsyncadd [#allocation3], %s141
      %s143 = sshll.u32 [#allocation2], 4
      %s144 = int_to_ptr.vmem [resolvable:$true] %s143
      %149 = dma.vmem_to_hbm [thread:$0]  %s144, 256, %s2, [#allocation3], 128, 128, 8
    $region13: #{tpu_custom_call.1} parent=1 // pred_fallthru
      _
    // Predicated region
    $region14: #{tpu_custom_call.1} parent=1 // pred_check
      _
    $region15: #{tpu_custom_call.1} parent=1 // pred_check_branch
      %151 = sbr.rel (0) target = $region17
    $region16: #{tpu_custom_call.1} parent=1 // pred_region
      %152 = dma.done [#allocation3], 256
    $region17: #{tpu_custom_call.1} parent=1 // pred_fallthru
      _
    %153 = vsyncpa [#allocation3], 1

</llo_original>
